<compile_context>
chip_gen: v7x
topology: tpu7x:2x2x1
jax: 0.10.0
libtpu: 0.0.40
codegen_flags: <defaults>
</compile_context>

<pallas_src>
import functools
import math

import jax
import jax.numpy as jnp
from jax.experimental import pallas as pl
from jax.experimental.pallas import tpu as pltpu


_TARGET_BLOCK_BYTES = 2 * 1024 * 1024   # per x tile; <~10 MiB live w/ double buffering
_VMEM_LIMIT_BYTES = 32 * 1024 * 1024    # within scoped/physical VMEM on v5e/v6e/v7x
_MIN_PARALLEL_BLOCKS = 4                # expose work for both v7x TensorCores


def build_pe_table(num_features: int, max_len: int = 500,
                   dtype=jnp.float32) -> jnp.ndarray:
    """Sinusoidal PE table, shape (max_len, num_features), built once in `dtype`.

    Matches torch:
        pe[:, 0::2] = sin(position * div_term)
        pe[:, 1::2] = cos(position * div_term)
    (also handles odd num_features, where the torch code would shape-error).
    """
    position = jnp.arange(max_len, dtype=jnp.float32)[:, None]            # (L, 1)
    div_term = jnp.exp(
        jnp.arange(0, num_features, 2, dtype=jnp.float32)
        * (-math.log(10000.0) / num_features))                            # (ceil(F/2),)
    angles = position * div_term                                          # (L, ceil(F/2))
    pe = jnp.zeros((max_len, num_features), dtype=jnp.float32)
    pe = pe.at[:, 0::2].set(jnp.sin(angles))
    pe = pe.at[:, 1::2].set(jnp.cos(angles[:, : num_features // 2]))
    return pe.astype(dtype)


def _sublane_pack(dtype) -> int:
    """Native sublane packing: 8 for 32-bit, 16 for 16-bit, 32 for 8-bit dtypes."""
    bits = jnp.dtype(dtype).itemsize * 8
    return max(8, 256 // bits)


def _round_up(x: int, m: int) -> int:
    return -(-x // m) * m


def _choose_rows(S: int, row_bytes: int, pack: int, budget_bytes: int,
                 min_blocks: int) -> int:
    """Row (sublane) extent of a block: multiple of the dtype's native pack (or
    the full extent S), sized to the VMEM byte budget, and capped so the
    'parallel' seq axis exposes >= min_blocks grid steps when S allows."""
    budget_rows = max(pack, (budget_bytes // max(1, row_bytes)) // pack * pack)
    ts = S if S <= budget_rows else budget_rows
    if S >= pack * min_blocks:
        ts = max(pack, min(ts, _round_up(pl.cdiv(S, min_blocks), pack)))
    if ts != S and ts % 8 != 0:   # hard (8, 128) tiling rule for partial blocks
        ts = max(8, (ts // 8) * 8)
    return ts


def _pe_add_kernel(x_ref, pe_ref, o_ref, *, reps: int):
    # x_ref/o_ref: (ts, tc); pe_ref: (ts, tc // reps).
    # Replicate PE across the flattened batch copies in VMEM (a few vreg copies,
    # fully hidden under the HBM DMA), then a single wide lane-dense add/store.
    pe = pe_ref[...]
    if reps > 1:
        pe = jnp.tile(pe, (1, reps))
    o_ref[...] = x_ref[...] + pe


def _pe_add_bcast3d_kernel(x_ref, pe_ref, o_ref):
    # x_ref/o_ref: (ts, tb, F); pe_ref: (ts, 1, F) -> plain broadcast over batch.
    o_ref[...] = x_ref[...] + pe_ref[...]


def positional_encoding(x: jnp.ndarray, pe_table: jnp.ndarray, *,
                        donate_x: bool = False,
                        target_block_bytes: int = _TARGET_BLOCK_BYTES,
                        vmem_limit_bytes: int = _VMEM_LIMIT_BYTES,
                        min_parallel_blocks: int = _MIN_PARALLEL_BLOCKS) -> jnp.ndarray:
    """x: (seq_len, batch, num_features); pe_table: (max_len, num_features)."""
    S, B, F = x.shape
    max_len, f_pe = pe_table.shape
    if f_pe != F:
        raise ValueError(f"pe_table features {f_pe} != x features {F}")
    if S > max_len:
        raise ValueError(f"seq_len {S} exceeds max_len {max_len}")
    if pe_table.dtype != x.dtype:
        pe_table = pe_table.astype(x.dtype)   # one-time cast outside the kernel

    itemsize = jnp.dtype(x.dtype).itemsize
    pack = _sublane_pack(x.dtype)
    C = B * F

    cost = pl.CostEstimate(
        flops=S * B * F,
        transcendentals=0,
        bytes_accessed=(2 * S * B * F + S * F) * itemsize,
    )
    aliases = {0: 0} if donate_x else {}

    def params(n_axes):
        return pltpu.CompilerParams(
            dimension_semantics=("parallel",) * n_axes,
            vmem_limit_bytes=vmem_limit_bytes,
        )

    def pe_rows(ts):
        # PE rows >= S (still < max_len) read by a partial seq block are added to
        # OOB-padded x rows whose stores are masked -> harmless.  Only slice the
        # table when a block would run past max_len itself.
        return pe_table if pl.cdiv(S, ts) * ts <= max_len else pe_table[:S]

    # ------------------- Path A: full-width flattened (S, B*F) -------------------
    if pack * C * itemsize <= target_block_bytes:
        x2d = x.reshape(S, C)
        ts = _choose_rows(S, C * itemsize, pack, target_block_bytes,
                          min_parallel_blocks)
        out2d = pl.pallas_call(
            functools.partial(_pe_add_kernel, reps=B),
            out_shape=jax.ShapeDtypeStruct((S, C), x.dtype),
            grid_spec=pltpu.PrefetchScalarGridSpec(
                num_scalar_prefetch=0,
                grid=(pl.cdiv(S, ts),),
                in_specs=[
                    pl.BlockSpec((ts, C), lambda i: (i, 0)),
                    pl.BlockSpec((ts, F), lambda i: (i, 0)),
                ],
                out_specs=pl.BlockSpec((ts, C), lambda i: (i, 0)),
            ),
            compiler_params=params(1),
            cost_estimate=cost,
            input_output_aliases=aliases,
        )(x2d, pe_rows(ts))
        return out2d.reshape(S, B, F)

    # ------------------- Path B: column-tiled flattened (S, B*F) -----------------
    col_budget = max(128, (target_block_bytes // (pack * itemsize)) // 128 * 128)
    tc = None
    reps = 1
    pe_col_blocks = 1
    if F % 128 == 0:
        if F <= col_budget:
            tc = (col_budget // F) * F          # multiple of F (and of 128)
            reps = tc // F
        else:
            # F itself too wide: pick the largest 128-multiple divisor of F that
            # fits the budget, select the PE column block with j % (F // tc).
            n128 = F // 128
            for d in range(min(col_budget // 128, n128), 0, -1):
                if n128 % d == 0:
                    tc = d * 128
                    break
            pe_col_blocks = F // tc
    else:
        lcm = F * 128 // math.gcd(F, 128)
        if lcm <= col_budget:
            tc = (col_budget // lcm) * lcm      # multiple of both F and 128
            reps = tc // F

    if tc is not None and pe_col_blocks == 1 and tc >= C:
        tc, reps = C, B                         # degenerates to full width

    if tc is not None:
        x2d = x.reshape(S, C)
        ts = _choose_rows(S, tc * itemsize, pack, target_block_bytes,
                          min_parallel_blocks)
        if pe_col_blocks == 1:
            pe_spec = pl.BlockSpec((ts, F), lambda i, j: (i, 0))
        else:
            pe_spec = pl.BlockSpec((ts, tc),
                                   lambda i, j, _n=pe_col_blocks: (i, j % _n))
        out2d = pl.pallas_call(
            functools.partial(_pe_add_kernel, reps=reps),
            out_shape=jax.ShapeDtypeStruct((S, C), x.dtype),
            grid_spec=pltpu.PrefetchScalarGridSpec(
                num_scalar_prefetch=0,
                # column axis innermost: a pinned PE block index is unchanged
                # across it, so the PE tile is not re-fetched.
                grid=(pl.cdiv(S, ts), pl.cdiv(C, tc)),
                in_specs=[
                    pl.BlockSpec((ts, tc), lambda i, j: (i, j)),
                    pe_spec,
                ],
                out_specs=pl.BlockSpec((ts, tc), lambda i, j: (i, j)),
            ),
            compiler_params=params(2),
            cost_estimate=cost,
            input_output_aliases=aliases,
        )(x2d, pe_rows(ts))
        return out2d.reshape(S, B, F)

    # ------------------- Path C: 3-D batch-minor fallback ------------------------
    # F % 128 != 0 and lcm(F, 128) exceeds the column budget.
    # TODO(synk): tiling F itself here would need Element-level PE column offsets.
    tb_budget = max(1, target_block_bytes // (pack * F * itemsize))
    tb = B if (B <= tb_budget or B <= 8) else max(8, (tb_budget // 8) * 8)
    ts = _choose_rows(S, tb * F * itemsize, pack, target_block_bytes,
                      min_parallel_blocks)
    pe3 = pe_rows(ts)[:, None, :]               # (L, 1, F): plain broadcast add
    return pl.pallas_call(
        _pe_add_bcast3d_kernel,
        out_shape=jax.ShapeDtypeStruct((S, B, F), x.dtype),
        grid_spec=pltpu.PrefetchScalarGridSpec(
            num_scalar_prefetch=0,
            grid=(pl.cdiv(S, ts), pl.cdiv(B, tb)),   # batch innermost: PE reused
            in_specs=[
                pl.BlockSpec((ts, tb, F), lambda i, j: (i, j, 0)),
                pl.BlockSpec((ts, 1, F), lambda i, j: (i, 0, 0)),
            ],
            out_specs=pl.BlockSpec((ts, tb, F), lambda i, j: (i, j, 0)),
        ),
        compiler_params=params(2),
        cost_estimate=cost,
        input_output_aliases=aliases,
    )(x, pe3)


if __name__ == "__main__":
    def _reference(x, pe_table):
        S = x.shape[0]
        return x + pe_table.astype(x.dtype)[:S][:, None, :]

    key = jax.random.PRNGKey(0)
    max_len = 500

    # (S, B, F, dtype, target_block_bytes or None) — exercises every spec path:
    #   default budget        -> full-width lane-dense path (A)
    #   tiny budget, F%128==0 -> column-tiled path (B), PE pinned / column-strided
    #   tiny budget, F%128!=0 -> lcm-tiled path (B) and 3-D fallback (C)
    cases = [
        (8, 2, 32, jnp.float32, None),       # A: module's typical toy shape
        (16, 8, 32, jnp.float32, None),      # A
        (16, 2, 128, jnp.float32, None),     # A
        (64, 4, 128, jnp.float32, None),     # A with >=4 seq blocks (megacore)
        (32, 2, 64, jnp.bfloat16, None),     # A, bf16 sublane pack = 16
        (32, 4, 128, jnp.float32, 4096),     # B: tc == F, PE pinned to col 0
        (16, 2, 256, jnp.float32, 4096),     # B: tc < F, PE column block = j % 2
        (16, 16, 32, jnp.float32, 8192),     # B: tc = 8*F via lcm, in-kernel tile
        (16, 4, 48, jnp.float32, 2048),      # C: 3-D batch-minor fallback
    ]
    for idx, (S, B, F, dtype, tbb) in enumerate(cases):
        k = jax.random.fold_in(key, idx)
        x = jax.random.normal(k, (S, B, F), dtype=jnp.float32).astype(dtype)
        pe_table = build_pe_table(F, max_len=max_len, dtype=dtype)
        kwargs = {} if tbb is None else {"target_block_bytes": tbb}
        out = jax.block_until_ready(positional_encoding(x, pe_table, **kwargs))
        ref = _reference(x, pe_table)
        assert out.shape == (S, B, F)
        assert out.dtype == x.dtype
        atol = 1e-6 if dtype == jnp.float32 else 2e-2
        assert jnp.allclose(out.astype(jnp.float32), ref.astype(jnp.float32),
                            atol=atol), f"mismatch vs reference for {(S, B, F, dtype)}"

    print("KERNEL_OK")
</pallas_src>

<mosaic_0001>
module attributes {stable_mosaic.version = 11 : i64} {
  func.func @_pe_add_kernel(%arg0: i32, %arg1: memref<8x64xf32, #tpu.memory_space<vmem>>, %arg2: memref<8x32xf32, #tpu.memory_space<vmem>>, %arg3: memref<8x64xf32, #tpu.memory_space<vmem>>) attributes {dimension_semantics = [#tpu.dimension_semantics<parallel>], iteration_bounds = array<i64: 1>, scalar_prefetch = 0 : i64, scratch_operands = 0 : i64, tpu.core_type = #tpu.core_type<tc>, window_params = [{transform_indices = @transform_0, window_bounds = array<i64: 8, 64>}, {transform_indices = @transform_1, window_bounds = array<i64: 8, 32>}, {transform_indices = @transform_2, window_bounds = array<i64: 8, 64>}]} {
    %c0 = arith.constant 0 : index
    %c0_0 = arith.constant 0 : index
    %0 = vector.load %arg2[%c0, %c0_0] : memref<8x32xf32, #tpu.memory_space<vmem>>, vector<8x32xf32>
    %1 = tpu.concatenate %0, %0 in 1 : vector<8x32xf32>, vector<8x32xf32> -> vector<8x64xf32>
    %c0_1 = arith.constant 0 : index
    %c0_2 = arith.constant 0 : index
    %2 = vector.load %arg1[%c0_1, %c0_2] : memref<8x64xf32, #tpu.memory_space<vmem>>, vector<8x64xf32>
    %3 = arith.addf %2, %1 : vector<8x64xf32>
    %c0_3 = arith.constant 0 : index
    %c0_4 = arith.constant 0 : index
    %4 = vector.load %arg3[%c0_3, %c0_4] : memref<8x64xf32, #tpu.memory_space<vmem>>, vector<8x64xf32>
    tpu.vector_store %arg3[%c0_3, %c0_4], %3 {strides = array<i32>} : memref<8x64xf32, #tpu.memory_space<vmem>>, vector<8x64xf32>,
    return
  }
  func.func @transform_0(%arg0: i32) -> (i32, i32) {
    %c0_i32 = arith.constant 0 : i32
    %c0_i32_0 = arith.constant 0 : i32
    return %arg0, %c0_i32 : i32, i32
  }
  func.func @transform_1(%arg0: i32) -> (i32, i32) {
    %c0_i32 = arith.constant 0 : i32
    %c0_i32_0 = arith.constant 0 : i32
    return %arg0, %c0_i32 : i32, i32
  }
  func.func @transform_2(%arg0: i32) -> (i32, i32) {
    %c0_i32 = arith.constant 0 : i32
    %c0_i32_0 = arith.constant 0 : i32
    return %arg0, %c0_i32 : i32, i32
  }
}

</mosaic_0001>

<llo_original>
// kernel: tpu_custom_call.1
$region0: #{tpu_custom_call.1}
  #allocation0 [shape = 'u32[]', space=smem, size = 0x4, offset = 0x4, fixed_abs, tag = 'smem constant byte address 0x4 - core index']
  #allocation1 [shape = 'u32[144,128]{1,0:T(1,128)}', space=vmem, size = 0x12000, scoped, tag = 'internal scratch']
  %s0 = inlined_call_operand.vmem [shape: f32[8,64], index: 0, kind: input, shape index: {}]
  %s1 = inlined_call_operand.vmem [shape: f32[500,32], index: 1, kind: input, shape index: {}]
  %s2 = inlined_call_operand.hbm [shape: f32[8,64], index: 2, kind: output, shape index: {}]
  %s3 = sld [smem:[#allocation0]]
  $region18: #{tpu_custom_call.1} parent=0
    _
  %s5 = ssub.s32 1, %s3
  %s6 = scalar_select 0, %s5, %s3
  $region1: #{tpu_custom_call.1} parent=0
    #allocation2 [shape = 'u8[4096]{0}', space=vmem, size = 0x1000, scoped, tag = 'output window, operand 0, single buffered']
    #allocation3 [shape = 's32[1]{0}', space=sflag, size = 0x4, scoped, tag = 'scoped memory for tpu_custom_call.1']
    %7 = vsyncpa [#allocation3], 0
    // Predicated region
    $region2: #{tpu_custom_call.1} parent=1 // pred_check
      _
    $region3: #{tpu_custom_call.1} parent=1 // pred_check_branch
      %9 = sbr.rel (0) target = $region5
    $region4: #{tpu_custom_call.1} parent=1 // pred_region
      _
    $region5: #{tpu_custom_call.1} parent=1 // pred_fallthru
      _
    // Predicated region
    $region6: #{tpu_custom_call.1} parent=1 // pred_check
      _
    $region7: #{tpu_custom_call.1} parent=1 // pred_check_branch
      %11 = sbr.rel (0) target = $region9
    $region8: #{tpu_custom_call.1} parent=1 // pred_region
      _
    $region9: #{tpu_custom_call.1} parent=1 // pred_fallthru
      _
    %v12 = vld [vmem:[%s1] sm:$0xff]
    %14 = vrot.lane.b32.xlu0 %v12, 32
    %v15 = vpop.permute.xlu0 %14
    %vm17 = vcmask 261120
    %v18 = vsel %vm17, %v12, %v15
    %v19 = vld [vmem:[%s0] sm:$0xff]
    %v20 = vadd.f32 %v19, %v18
    %vm21 = vcmask 523264
    %22 = vst.msk [vmem:[#allocation2] sm:$0xff] %vm21, %v20
    // Predicated region
    $region10: #{tpu_custom_call.1} parent=1 // pred_check
      _
    $region11: #{tpu_custom_call.1} parent=1 // pred_check_branch
      %24 = sbr.rel (0) target = $region13
    $region12: #{tpu_custom_call.1} parent=1 // pred_region
      %s26 = ssub.s32 128, 128
      %27 = vsyncadd [#allocation3], %s26
      %s29 = sshll.u32 [#allocation2], 4
      %s30 = int_to_ptr.vmem [resolvable:$true] %s29
      %32 = dma.vmem_to_hbm [thread:$0]  %s30, 128, %s2, [#allocation3]
    $region13: #{tpu_custom_call.1} parent=1 // pred_fallthru
      _
    // Predicated region
    $region14: #{tpu_custom_call.1} parent=1 // pred_check
      _
    $region15: #{tpu_custom_call.1} parent=1 // pred_check_branch
      %34 = sbr.rel (0) target = $region17
    $region16: #{tpu_custom_call.1} parent=1 // pred_region
      %35 = dma.done [#allocation3], 128
    $region17: #{tpu_custom_call.1} parent=1 // pred_fallthru
      _
    %36 = vsyncpa [#allocation3], 1

</llo_original>
